<compile_context>
chip_gen: v5e
topology: v5e:2x2
jax: 0.10.0
libtpu: 0.0.40
codegen_flags: <defaults>
</compile_context>

<pallas_src>
import math
import functools

import jax
import jax.numpy as jnp
from jax.experimental import pallas as pl
from jax.experimental.pallas import tpu as pltpu


def _pos_embedding_kernel(scale, vocab, ids_ref, emb_ref, pos_ref, out_ref):
    # ids_ref : (1, TL, 1) int32   token ids for this (batch, seq-tile)
    # emb_ref : (V, Dp)    float32 embedding table (resident across the grid)
    # pos_ref : (TL, Dp)   float32 batch-invariant positional encoding tile
    # out_ref : (1, TL, Dp) float32
    ids = ids_ref[0]                                                   # (TL, 1)
    tl = ids.shape[0]
    iota = jax.lax.broadcasted_iota(jnp.int32, (tl, vocab), 1)         # (TL, V)
    onehot = (ids == iota).astype(jnp.float32)                         # built in-register, never in HBM
    seq_embed = jnp.dot(onehot, emb_ref[...],
                        preferred_element_type=jnp.float32)            # (TL, Dp)
    out_ref[0] = seq_embed * scale + pos_ref[...]


def pos_embedding_forward(src_seq, embed_seq_w, pair_pos_w, *, model_dim, max_len,
                          rel_pos_enc, pe=None, seq_tile=512):
    """Pallas implementation of PosEmbedding.forward.

    src_seq     : [B, L] int32
    embed_seq_w : [V, D] float32     (nn.Embedding weight)
    pair_pos_w  : [D, K] float32     (nn.Linear weight, PyTorch layout (out, in))
    pe          : [max_len, D] float32 sinusoidal table (only if rel_pos_enc=False)
    returns     : [B, L, D] float32
    """
    B, L = src_seq.shape
    V, D = embed_seq_w.shape
    assert D == model_dim
    scale = float(math.sqrt(model_dim // 2))

    # ---- batch-invariant positional encoding, computed exactly once (glue) ----
    if rel_pos_enc:
        residue_index = jnp.clip(jnp.arange(L), 0, max_len - 1)
        # one_hot(residue_index) @ W^T  ==  row gather of W^T: no one-hot, no matmul.
        pos_enc = jnp.take(pair_pos_w.T.astype(jnp.float32), residue_index, axis=0)   # [L, D]
    else:
        assert pe is not None
        pos_enc = pe[:L].astype(jnp.float32) @ pair_pos_w.T.astype(jnp.float32)       # [L, D]

    # ---- lane-dense padding of model_dim to a multiple of 128 ----
    Dp = ((D + 127) // 128) * 128
    emb = embed_seq_w.astype(jnp.float32)
    if Dp != D:
        emb = jnp.pad(emb, ((0, 0), (0, Dp - D)))
        pos_enc = jnp.pad(pos_enc, ((0, 0), (0, Dp - D)))

    # ---- sequence tiling ----
    if L <= seq_tile:
        TL = L                      # full-L block is always layout-legal
    else:
        TL = seq_tile               # multiple of 8 and 128
    num_l = pl.cdiv(L, TL)

    ids = src_seq.astype(jnp.int32)[:, :, None]        # [B, L, 1]

    kernel = functools.partial(_pos_embedding_kernel, scale, V)
    out = pl.pallas_call(
        kernel,
        out_shape=jax.ShapeDtypeStruct((B, L, Dp), jnp.float32),
        grid_spec=pltpu.PrefetchScalarGridSpec(
            num_scalar_prefetch=0,
            grid=(B, num_l),
            in_specs=[
                pl.BlockSpec((1, TL, 1), lambda b, l: (b, l, 0)),   # token ids
                pl.BlockSpec((V, Dp), lambda b, l: (0, 0)),         # embedding table (resident)
                pl.BlockSpec((TL, Dp), lambda b, l: (l, 0)),        # pos-enc tile (batch-invariant)
            ],
            out_specs=pl.BlockSpec((1, TL, Dp), lambda b, l: (b, l, 0)),
        ),
        compiler_params=pltpu.CompilerParams(
            dimension_semantics=("parallel", "parallel"),
            vmem_limit_bytes=32 * 1024 * 1024,
        ),
    )(ids, emb, pos_enc)

    if Dp != D:
        out = out[:, :, :D]
    return out


def make_sinusoidal_pe(max_len, model_dim):
    position = jnp.arange(max_len, dtype=jnp.float32)[:, None]
    div_term = jnp.exp(jnp.arange(0, model_dim, 2, dtype=jnp.float32)
                       * -(math.log(10000.0) / model_dim))
    pe = jnp.zeros((max_len, model_dim), dtype=jnp.float32)
    pe = pe.at[:, 0::2].set(jnp.sin(position * div_term))
    pe = pe.at[:, 1::2].set(jnp.cos(position * div_term))
    return pe


def _reference_forward(src_seq, embed_seq_w, pair_pos_w, *, model_dim, max_len,
                       rel_pos_enc, pe=None):
    scale = math.sqrt(model_dim // 2)
    seq_embed = embed_seq_w[src_seq] * scale
    if rel_pos_enc:
        B, L = src_seq.shape
        residue_index = jnp.clip(jnp.arange(L), 0, max_len - 1)
        rel = jax.nn.one_hot(residue_index, max_len, dtype=jnp.float32)
        pos = rel @ pair_pos_w.T
        return seq_embed + pos[None]
    else:
        pos = pe[:src_seq.shape[1]] @ pair_pos_w.T
        return seq_embed + pos[None]


if __name__ == "__main__":
    # Small, module-consistent shapes.
    vocab, model_dim, max_len = 8, 32, 16
    batch, seq_len = 2, 8
    initializer_range = 0.02

    key = jax.random.PRNGKey(0)
    k_seq, k_emb, k_rel, k_abs = jax.random.split(key, 4)

    src_seq = jax.random.randint(k_seq, (batch, seq_len), 0, vocab, dtype=jnp.int32)
    embed_seq_w = initializer_range * jax.random.normal(k_emb, (vocab, model_dim), jnp.float32)

    # ---- rel_pos_enc = True branch: Linear(max_len, model_dim, bias=False) ----
    pair_w_rel = initializer_range * jax.random.normal(k_rel, (model_dim, max_len), jnp.float32)
    out_rel = pos_embedding_forward(
        src_seq, embed_seq_w, pair_w_rel,
        model_dim=model_dim, max_len=max_len, rel_pos_enc=True)
    out_rel = jax.block_until_ready(out_rel)
    ref_rel = _reference_forward(
        src_seq, embed_seq_w, pair_w_rel,
        model_dim=model_dim, max_len=max_len, rel_pos_enc=True)

    # ---- rel_pos_enc = False branch: Linear(model_dim, model_dim) on sinusoidal pe ----
    pair_w_abs = initializer_range * jax.random.normal(k_abs, (model_dim, model_dim), jnp.float32)
    pe = make_sinusoidal_pe(max_len, model_dim)
    out_abs = pos_embedding_forward(
        src_seq, embed_seq_w, pair_w_abs,
        model_dim=model_dim, max_len=max_len, rel_pos_enc=False, pe=pe)
    out_abs = jax.block_until_ready(out_abs)
    ref_abs = _reference_forward(
        src_seq, embed_seq_w, pair_w_abs,
        model_dim=model_dim, max_len=max_len, rel_pos_enc=False, pe=pe)

    assert out_rel.shape == (batch, seq_len, model_dim)
    assert out_abs.shape == (batch, seq_len, model_dim)
    assert jnp.allclose(out_rel, ref_rel, atol=1e-5, rtol=1e-5)
    assert jnp.allclose(out_abs, ref_abs, atol=1e-5, rtol=1e-5)
    print("KERNEL_OK")
</pallas_src>

<mosaic_0001>
module attributes {stable_mosaic.version = 11 : i64} {
  func.func @_pos_embedding_kernel(%arg0: i32, %arg1: i32, %arg2: memref<1x8x1xi32, #tpu.memory_space<vmem>>, %arg3: memref<8x128xf32, #tpu.memory_space<vmem>>, %arg4: memref<8x128xf32, #tpu.memory_space<vmem>>, %arg5: memref<1x8x128xf32, #tpu.memory_space<vmem>>) attributes {dimension_semantics = [#tpu.dimension_semantics<parallel>, #tpu.dimension_semantics<parallel>], iteration_bounds = array<i64: 2, 1>, scalar_prefetch = 0 : i64, scratch_operands = 0 : i64, tpu.core_type = #tpu.core_type<tc>, window_params = [{transform_indices = @transform_0, window_bounds = array<i64: 1, 8, 1>}, {pipeline_mode = #tpu.pipeline_mode<synchronous>, transform_indices = @transform_1, window_bounds = array<i64: 8, 128>}, {transform_indices = @transform_2, window_bounds = array<i64: 8, 128>}, {transform_indices = @transform_3, window_bounds = array<i64: 1, 8, 128>}]} {
    %c0 = arith.constant 0 : index
    %c0_0 = arith.constant 0 : index
    %c0_1 = arith.constant 0 : index
    %0 = vector.load %arg2[%c0, %c0_0, %c0_1] : memref<1x8x1xi32, #tpu.memory_space<vmem>>, vector<1x8x1xi32>
    %1 = vector.shape_cast %0 : vector<1x8x1xi32> to vector<8x1xi32>
    %2 = tpu.iota {dimensions = array<i32: 1>} : vector<8x8xi32>
    %3 = vector.broadcast %1 : vector<8x1xi32> to vector<8x8xi32>
    %4 = arith.cmpi eq, %3, %2 : vector<8x8xi32>
    %5 = arith.extui %4 : vector<8x8xi1> to vector<8x8xi32>
    %6 = arith.sitofp %5 : vector<8x8xi32> to vector<8x8xf32>
    %c0_2 = arith.constant 0 : index
    %c0_3 = arith.constant 0 : index
    %7 = vector.load %arg3[%c0_2, %c0_3] : memref<8x128xf32, #tpu.memory_space<vmem>>, vector<8x128xf32>
    %cst = arith.constant dense<0.000000e+00> : vector<8x128xf32>
    %8 = tpu.matmul %6, %7, %cst {dimension_numbers = #tpu.dot_dimension_numbers<[1], [0], [0], [1], [0, 0, 1, 1], [], []>} : vector<8x8xf32>, vector<8x128xf32>, vector<8x128xf32> -> vector<8x128xf32>
    %cst_4 = arith.constant 4.000000e+00 : f32
    %9 = vector.broadcast %cst_4 : f32 to vector<8x128xf32>
    %10 = arith.mulf %8, %9 : vector<8x128xf32>
    %c0_5 = arith.constant 0 : index
    %c0_6 = arith.constant 0 : index
    %11 = vector.load %arg4[%c0_5, %c0_6] : memref<8x128xf32, #tpu.memory_space<vmem>>, vector<8x128xf32>
    %12 = arith.addf %10, %11 : vector<8x128xf32>
    %c0_7 = arith.constant 0 : index
    %c0_8 = arith.constant 0 : index
    %c0_9 = arith.constant 0 : index
    %13 = vector.load %arg5[%c0_7, %c0_8, %c0_9] : memref<1x8x128xf32, #tpu.memory_space<vmem>>, vector<1x8x128xf32>
    %14 = vector.shape_cast %13 : vector<1x8x128xf32> to vector<8x128xf32>
    %15 = vector.shape_cast %12 : vector<8x128xf32> to vector<1x8x128xf32>
    tpu.vector_store %arg5[%c0_7, %c0_8, %c0_9], %15 {strides = array<i32>} : memref<1x8x128xf32, #tpu.memory_space<vmem>>, vector<1x8x128xf32>,
    return
  }
  func.func @transform_0(%arg0: i32, %arg1: i32) -> (i32, i32, i32) {
    %c0_i32 = arith.constant 0 : i32
    %c0_i32_0 = arith.constant 0 : i32
    return %arg0, %arg1, %c0_i32 : i32, i32, i32
  }
  func.func @transform_1(%arg0: i32, %arg1: i32) -> (i32, i32) {
    %c0_i32 = arith.constant 0 : i32
    %c0_i32_0 = arith.constant 0 : i32
    %c0_i32_1 = arith.constant 0 : i32
    return %c0_i32, %c0_i32_0 : i32, i32
  }
  func.func @transform_2(%arg0: i32, %arg1: i32) -> (i32, i32) {
    %c0_i32 = arith.constant 0 : i32
    %c0_i32_0 = arith.constant 0 : i32
    return %arg1, %c0_i32 : i32, i32
  }
  func.func @transform_3(%arg0: i32, %arg1: i32) -> (i32, i32, i32) {
    %c0_i32 = arith.constant 0 : i32
    %c0_i32_0 = arith.constant 0 : i32
    return %arg0, %arg1, %c0_i32 : i32, i32, i32
  }
}

</mosaic_0001>

<llo_original>
// kernel: tpu_custom_call.1
$region0: #{tpu_custom_call.1}
  #allocation0 [shape = 'u32[]', space=smem, size = 0x4, offset = 0x4, fixed_abs, tag = 'smem constant byte address 0x4 - core index']
  #allocation1 [shape = 'u32[72,128]{1,0:T(1,128)}', space=vmem, size = 0x9000, scoped, tag = 'internal scratch']
  %s0 = inlined_call_operand.vmem [shape: s32[2,8,1], index: 0, kind: input, shape index: {}]
  %s1 = inlined_call_operand.vmem [shape: f32[8,128], index: 1, kind: input, shape index: {}]
  %s2 = inlined_call_operand.vmem [shape: f32[8,128], index: 2, kind: input, shape index: {}]
  %s3 = inlined_call_operand.hbm [shape: f32[2,8,128], index: 3, kind: output, shape index: {}]
  %s4 = sld [smem:[#allocation0]]
  $region45: #{tpu_custom_call.1} parent=0
    _
  %s6 = ssub.s32 1, %s4
  %s7 = scalar_select 0, %s6, %s4
  $region1: #{tpu_custom_call.1} parent=0
    #allocation2 [shape = 'u8[8192]{0}', space=vmem, size = 0x2000, scoped, tag = 'output window, operand 0']
    #allocation3 [shape = 's32[2]{0}', space=sflag, size = 0x8, scoped, tag = 'scoped memory for tpu_custom_call.1']
    %8 = vsyncpa [#allocation3], 0
    %s9 = scalar_lea.sflag [#allocation3], 1
    %10 = vsyncpa %s9, 0
    loop: start=0, step=1, limit=4
    $region2: #{tpu_custom_call.1} parent=1 // loop_pre_header
      _
    $region3: #{tpu_custom_call.1} parent=1 // loop_header
      %s12 = sphi 0, %s16
      %p13 = scmp.ge.s32.totalorder %s12, 4
      %s19 = sphi 0, %s31
      %s20 = sphi 0, %s27
      %s21 = sphi 0, %s19
      %s22 = sphi 0, %s20
      %s23 = sphi 0, %s21
      %s24 = sphi 0, %s22
      %s36 = sphi 0, %s38
      %s39 = sphi 0, %s36
      %s40 = sphi 0, %s39
      %s56 = sphi 0, %s40
      %s60 = sphi 0, %s60
      %s62 = sphi 0, %s60
      %s63 = sphi 0, %s62
      %s77 = sphi 0, %s63
      %s83 = sphi 0, %s85
      %s86 = sphi 0, %s83
      %s87 = sphi 0, %s86
      %s103 = sphi 0, %s87
      %s111 = sphi 0, %s113
      %s114 = sphi 0, %s111
      %s115 = sphi 0, %s114
      %s131 = sphi 0, %s115
    $region4: #{tpu_custom_call.1} parent=1 // loop_header_branch
      %15 = sbr.rel (%p13) target = $region8
    $region5: #{tpu_custom_call.1} parent=1 // loop_body
      %s17 = ssub.s32 %s12, 1
      %s18 = ssub.s32 %s12, 2
      %s25 = sadd.s32 1, %s20
      %p26 = scmp.ge.s32.totalorder %s25, 1
      %s27 = scalar_select %p26, 0, %s25
      %s28 = sadd.s32 1, %s19
      %s29 = scalar_select %p26, %s28, %s19
      %p30 = scmp.ge.s32.totalorder %s29, 2
      %s31 = scalar_select %p30, 0, %s29
      %s32 = ssub.s32 %s19, %s31
      %s33 = ssub.s32 %s20, %s27
      %s34 = sor.u32 %s32, %s33
      %p35 = scmp.eq.s32.totalorder %s34, 0
      %s37 = sadd.s32 %s36, 1
      %s38 = scalar_select %p35, %s36, %s37
      %p41 = pneg %p35
      %p42 = scmp.eq.s32.totalorder %s12, 1
      %p43 = por %p41, %p42
      %p44 = scmp.ne.s32.totalorder %s36, %s39
      %p45 = scmp.eq.s32.totalorder %s12, 0
      %p46 = por %p44, %p45
      %p47 = scmp.ne.s32.totalorder %s36, %s39
      %p48 = scmp.eq.s32.totalorder %s17, 1
      %p49 = por %p47, %p48
      %p50 = scmp.ne.s32.totalorder %s39, %s40
      %p51 = scmp.eq.s32.totalorder %s17, 0
      %p52 = por %p50, %p51
      %p53 = scmp.ne.s32.totalorder %s39, %s40
      %p54 = scmp.eq.s32.totalorder %s18, 1
      %p55 = por %p53, %p54
      %p57 = scmp.ne.s32.totalorder %s40, %s56
      %p58 = scmp.eq.s32.totalorder %s18, 0
      %p59 = por %p57, %p58
      %s61 = sadd.s32 %s60, 1
      %p64 = scmp.eq.s32.totalorder %s12, 1
      %p65 = scmp.ne.s32.totalorder %s60, %s62
      %p66 = scmp.eq.s32.totalorder %s12, 0
      %p67 = por %p65, %p66
      %p68 = scmp.ne.s32.totalorder %s60, %s62
      %p69 = scmp.eq.s32.totalorder %s17, 1
      %p70 = por %p68, %p69
      %p71 = scmp.ne.s32.totalorder %s62, %s63
      %p72 = scmp.eq.s32.totalorder %s17, 0
      %p73 = por %p71, %p72
      %p74 = scmp.ne.s32.totalorder %s62, %s63
      %p75 = scmp.eq.s32.totalorder %s18, 1
      %p76 = por %p74, %p75
      %p78 = scmp.ne.s32.totalorder %s63, %s77
      %p79 = scmp.eq.s32.totalorder %s18, 0
      %p80 = por %p78, %p79
      %s81 = ssub.s32 %s20, %s27
      %p82 = scmp.eq.s32.totalorder %s81, 0
      %s84 = sadd.s32 %s83, 1
      %s85 = scalar_select %p82, %s83, %s84
      %p88 = pneg %p82
      %p89 = scmp.eq.s32.totalorder %s12, 1
      %p90 = por %p88, %p89
      %p91 = scmp.ne.s32.totalorder %s83, %s86
      %p92 = scmp.eq.s32.totalorder %s12, 0
      %p93 = por %p91, %p92
      %p94 = scmp.ne.s32.totalorder %s83, %s86
      %p95 = scmp.eq.s32.totalorder %s17, 1
      %p96 = por %p94, %p95
      %p97 = scmp.ne.s32.totalorder %s86, %s87
      %p98 = scmp.eq.s32.totalorder %s17, 0
      %p99 = por %p97, %p98
      %p100 = scmp.ne.s32.totalorder %s86, %s87
      %p101 = scmp.eq.s32.totalorder %s18, 1
      %p102 = por %p100, %p101
      %p104 = scmp.ne.s32.totalorder %s87, %s103
      %p105 = scmp.eq.s32.totalorder %s18, 0
      %p106 = por %p104, %p105
      %s107 = ssub.s32 %s19, %s31
      %s108 = ssub.s32 %s20, %s27
      %s109 = sor.u32 %s107, %s108
      %p110 = scmp.eq.s32.totalorder %s109, 0
      %s112 = sadd.s32 %s111, 1
      %s113 = scalar_select %p110, %s111, %s112
      %p116 = pneg %p110
      %p117 = scmp.eq.s32.totalorder %s12, 1
      %p118 = por %p116, %p117
      %p119 = scmp.ne.s32.totalorder %s111, %s114
      %p120 = scmp.eq.s32.totalorder %s12, 0
      %p121 = por %p119, %p120
      %p122 = scmp.ne.s32.totalorder %s111, %s114
      %p123 = scmp.eq.s32.totalorder %s17, 1
      %p124 = por %p122, %p123
      %p125 = scmp.ne.s32.totalorder %s114, %s115
      %p126 = scmp.eq.s32.totalorder %s17, 0
      %p127 = por %p125, %p126
      %p128 = scmp.ne.s32.totalorder %s114, %s115
      %p129 = scmp.eq.s32.totalorder %s18, 1
      %p130 = por %p128, %p129
      %p132 = scmp.ne.s32.totalorder %s115, %s131
      %p133 = scmp.eq.s32.totalorder %s18, 0
      %p134 = por %p132, %p133
      %p135 = scmp.le.s32.totalorder 1, %s12
      %p136 = scmp.lt.s32.totalorder %s12, 3
      %p137 = pnand %p135, %p136
      %p138 = pneg %p137
      // Predicated region
      $region9: #{tpu_custom_call.1} parent=5 // pred_check
        _
      $region10: #{tpu_custom_call.1} parent=5 // pred_check_branch
        %140 = sbr.rel (%p137) target = $region12
      $region11: #{tpu_custom_call.1} parent=5 // pred_region
        %s141 = ssub.s32 %s12, 1
        // Predicated region
        $region13: #{tpu_custom_call.1} parent=11 // pred_check
          %p142 = pneg %p73
        $region14: #{tpu_custom_call.1} parent=11 // pred_check_branch
          %144 = sbr.rel (%p142) target = $region16
        $region15: #{tpu_custom_call.1} parent=11 // pred_region
          _
        $region16: #{tpu_custom_call.1} parent=11 // pred_fallthru
          _
        // Predicated region
        $region17: #{tpu_custom_call.1} parent=11 // pred_check
          %p145 = pneg %p99
        $region18: #{tpu_custom_call.1} parent=11 // pred_check_branch
          %147 = sbr.rel (%p145) target = $region20
        $region19: #{tpu_custom_call.1} parent=11 // pred_region
          %p148 = scmp.lt.s32.totalorder %s22, 0
          %s149 = scalar_select %p148, %s22, 0
          %s150 = smul.addr %s149, 8
          %s151 = scalar_lea.vmem %s2, %s150
        $region20: #{tpu_custom_call.1} parent=11 // pred_fallthru
          _
      $region12: #{tpu_custom_call.1} parent=5 // pred_fallthru
        _
      %p152 = scmp.lt.s32.totalorder %s12, 2
      // Predicated region
      $region21: #{tpu_custom_call.1} parent=5 // pred_check
        %p153 = pneg %p152
      $region22: #{tpu_custom_call.1} parent=5 // pred_check_branch
        %155 = sbr.rel (%p153) target = $region24
      $region23: #{tpu_custom_call.1} parent=5 // pred_region
        // Predicated region
        $region25: #{tpu_custom_call.1} parent=23 // pred_check
          %p156 = pneg %p46
        $region26: #{tpu_custom_call.1} parent=23 // pred_check_branch
          %158 = sbr.rel (%p156) target = $region28
        $region27: #{tpu_custom_call.1} parent=23 // pred_region
          %p159 = scmp.lt.s32.totalorder %s19, 1
          %s160 = scalar_select %p159, %s19, 1
          %p161 = scmp.lt.s32.totalorder %s20, 0
          %s162 = scalar_select %p161, %s20, 0
          %s163 = sadd.s32 %s162, %s160
          %s164 = smul.addr %s163, 8
          %s165 = scalar_lea.vmem %s0, %s164
        $region28: #{tpu_custom_call.1} parent=23 // pred_fallthru
          _
      $region24: #{tpu_custom_call.1} parent=5 // pred_fallthru
        _
      %p166 = scmp.le.s32.totalorder 1, %s12
      %p167 = scmp.lt.s32.totalorder %s12, 3
      %p168 = pnand %p166, %p167
      %p169 = pneg %p168
      // Predicated region
      $region29: #{tpu_custom_call.1} parent=5 // pred_check
        _
      $region30: #{tpu_custom_call.1} parent=5 // pred_check_branch
        %171 = sbr.rel (%p168) target = $region32
      $region31: #{tpu_custom_call.1} parent=5 // pred_region
        %s172 = ssub.s32 %s12, 1
        %p173 = scmp.lt.s32.totalorder %s21, 1
        %s174 = scalar_select %p173, %s21, 1
        %p175 = scmp.lt.s32.totalorder %s22, 0
        %s176 = scalar_select %p175, %s22, 0
        %s177 = sadd.s32 %s176, %s174
        %s178 = smul.addr %s177, 8
        %s179 = scalar_lea.vmem %s0, %s178
        %p180 = pneg %p52
        %p181 = pneg %p49
        %p182 = pneg %p73
        %p183 = pneg %p70
        %p184 = scmp.lt.s32.totalorder %s22, 0
        %s185 = scalar_select %p184, %s22, 0
        %s186 = smul.addr %s185, 8
        %s187 = scalar_lea.vmem %s2, %s186
        %p188 = pneg %p99
        %p189 = pneg %p96
        %p190 = pneg %p127
        %p191 = pneg %p124
        %s192 = sand.u32 %s114, 1
        %s193 = scalar_lea.sflag [#allocation3], %s192
        %s194 = sand.u32 %s114, 1
        %s195 = smul.addr %s194, 8
        %s196 = scalar_lea.vmem [#allocation2], %s195
        %p197 = scmp.lt.s32.totalorder %s21, 1
        %s198 = scalar_select %p197, %s21, 1
        %p199 = scmp.lt.s32.totalorder %s22, 0
        %s200 = scalar_select %p199, %s22, 0
        %s201 = sadd.s32 %s200, %s198
        %s202 = smul.addr %s201, 8
        %s203 = scalar_lea.vmem %s0, %s202
        %p204 = scmp.lt.s32.totalorder %s22, 0
        %s205 = scalar_select %p204, %s22, 0
        %s206 = smul.addr %s205, 8
        %s207 = scalar_lea.vmem %s2, %s206
        %v208 = vld [vmem:[%s203] sm:$0xff]
        %v209 = vlaneseq
        %v210 = vand.u32 %v209, 127
        %211 = vset.pattern.permute.xlu0 0
        %212 = vperm.xlu0 %211, %v208
        %v213 = vpop.permute.xlu0 %212
        %vm214 = vcmp.eq.s32.totalorder %v213, %v210
        %v215 = vsel %vm214, 1, 0
        %v216 = vcvt.s32.f32 %v215
        %v217 = vld [vmem:[%s1] sm:$0xff]
        %vm218 = vcmask 64512
        %v220 = vsel %vm218, %v216, 0
        %222 = vmatpush.msra.mxu0 0.0
        %223 = vmatpush.msra.mxu0 0.0
        %224 = vmatpush.msra.mxu0 0.0
        %225 = vmatpush.msra.mxu0 0.0
        %226 = vmatpush.msra.mxu0 0.0
        %227 = vmatpush.msra.mxu0 0.0
        %228 = vmatpush.msra.mxu0 0.0
        %229 = vmatpush.msra.mxu0 0.0
        %230 = vmatpush.msra.mxu0 0.0
        %231 = vmatpush.msra.mxu0 0.0
        %232 = vmatpush.msra.mxu0 0.0
        %233 = vmatpush.msra.mxu0 0.0
        %234 = vmatpush.msra.mxu0 0.0
        %235 = vmatpush.msra.mxu0 0.0
        %236 = vmatpush.msra.mxu0 0.0
        %237 = vmatpush.msra.mxu0 %v217
        %238 = vmatmul.f32.gmra.mxu0 %v220
        %v239 = vpop.f32.mrf.mxu0
        %v240 = vadd.f32 0.0, %v239
        %241 = vdwg.mxu0
        %v242 = vmul.f32 %v240, 4.0
        %v243 = vld [vmem:[%s207] sm:$0xff]
        %v244 = vadd.f32 %v242, %v243
        %245 = vst [vmem:[%s196] sm:$0xff] %v244
        %s246 = sand.u32 %s114, 1
        %s247 = scalar_lea.sflag [#allocation3], %s246
        %s248 = sand.u32 %s114, 1
        %s249 = smul.addr %s248, 8
        %s250 = scalar_lea.vmem [#allocation2], %s249
        // Predicated region
        $region33: #{tpu_custom_call.1} parent=31 // pred_check
          %p251 = pneg %p124
        $region34: #{tpu_custom_call.1} parent=31 // pred_check_branch
          %253 = sbr.rel (%p251) target = $region36
        $region35: #{tpu_custom_call.1} parent=31 // pred_region
          %255 = vsyncadd %s247, 0
          %s256 = sadd.s32 %s22, %s21
          %s257 = smul.addr %s256, 8
          %s258 = scalar_lea.hbm %s3, %s257
          %s260 = sshll.u32 %s250, 4
          %s261 = int_to_ptr.vmem [resolvable:$true] %s260
          %s262 = sshll.u32 %s258, 4
          %s263 = int_to_ptr.hbm [resolvable:$true] %s262
          %265 = dma.vmem_to_hbm [thread:$0]  %s261, 128, %s263, %s247
        $region36: #{tpu_custom_call.1} parent=31 // pred_fallthru
          _
      $region32: #{tpu_custom_call.1} parent=5 // pred_fallthru
        _
      %p266 = scmp.le.s32.totalorder 2, %s12
      // Predicated region
      $region37: #{tpu_custom_call.1} parent=5 // pred_check
        %p267 = pneg %p266
      $region38: #{tpu_custom_call.1} parent=5 // pred_check_branch
        %269 = sbr.rel (%p267) target = $region40
      $region39: #{tpu_custom_call.1} parent=5 // pred_region
        %s270 = ssub.s32 %s12, 2
        // Predicated region
        $region41: #{tpu_custom_call.1} parent=39 // pred_check
          %p271 = pneg %p130
        $region42: #{tpu_custom_call.1} parent=39 // pred_check_branch
          %273 = sbr.rel (%p271) target = $region44
        $region43: #{tpu_custom_call.1} parent=39 // pred_region
          %s274 = sand.u32 %s115, 1
          %s275 = scalar_lea.sflag [#allocation3], %s274
          %s276 = sand.u32 %s115, 1
          %s277 = smul.addr %s276, 8
          %s278 = scalar_lea.vmem [#allocation2], %s277
          %280 = dma.done %s275, 128
        $region44: #{tpu_custom_call.1} parent=39 // pred_fallthru
          _
      $region40: #{tpu_custom_call.1} parent=5 // pred_fallthru
        _
    $region6: #{tpu_custom_call.1} parent=1 // loop_footer
      %s16 = sadd.s32 1, %s12
    $region7: #{tpu_custom_call.1} parent=1 // loop_footer_branch
      %11 = sbr.rel target = $region3
    $region8: #{tpu_custom_call.1} parent=1 // loop_exit
      _
    %281 = vsyncpa [#allocation3], 1
    %s282 = scalar_lea.sflag [#allocation3], 1
    %283 = vsyncpa %s282, 1

</llo_original>
